<compile_context>
chip_gen: v6e
topology: v6e:2x2x1
jax: 0.10.0
libtpu: 0.0.40
codegen_flags: <defaults>
</compile_context>

<pallas_src>
import functools

import jax
import jax.numpy as jnp
from jax.experimental import pallas as pl
from jax.experimental.pallas import tpu as pltpu

LANE = 128  # TPU lane width; the output feature dim is padded to a multiple of this.


def _round_up(x: int, m: int) -> int:
    return ((x + m - 1) // m) * m


# ---------------------------------------------------------------------------
# Kernels
# ---------------------------------------------------------------------------
def _linear_act_kernel(h_ref, w_ref, b_ref, o_ref, *, apply_relu: bool):
    """Full-K block: one MXU pass, bias + activation epilogue (used by the
    single-pass and the F-tiled paths)."""
    acc = jnp.dot(h_ref[...], w_ref[...], preferred_element_type=jnp.float32)
    acc = acc + b_ref[...]                 # f32 bias add, broadcast over rows
    if apply_relu:
        acc = jnp.maximum(acc, 0.0)
    o_ref[...] = acc.astype(o_ref.dtype)


def _linear_act_ktiled_f32out_kernel(h_ref, w_ref, b_ref, o_ref, *, apply_relu: bool):
    """K-tiled path, f32 output: accumulate directly into the resident o_ref block."""
    k = pl.program_id(1)

    @pl.when(k == 0)
    def _():
        o_ref[...] = jnp.zeros_like(o_ref)

    o_ref[...] += jnp.dot(h_ref[...], w_ref[...], preferred_element_type=jnp.float32)

    @pl.when(k == pl.num_programs(1) - 1)
    def _():
        acc = o_ref[...] + b_ref[...]
        if apply_relu:
            acc = jnp.maximum(acc, 0.0)
        o_ref[...] = acc


def _linear_act_ktiled_scratch_kernel(h_ref, w_ref, b_ref, o_ref, acc_ref, *,
                                      apply_relu: bool):
    """K-tiled path, non-f32 output: f32 VMEM scratch accumulator."""
    k = pl.program_id(1)

    @pl.when(k == 0)
    def _():
        acc_ref[...] = jnp.zeros_like(acc_ref)

    acc_ref[...] += jnp.dot(h_ref[...], w_ref[...], preferred_element_type=jnp.float32)

    @pl.when(k == pl.num_programs(1) - 1)
    def _():
        acc = acc_ref[...] + b_ref[...]
        if apply_relu:
            acc = jnp.maximum(acc, 0.0)
        o_ref[...] = acc.astype(o_ref.dtype)


# ---------------------------------------------------------------------------
# Wrapper
# ---------------------------------------------------------------------------
def _tpu_vmem_capacity_bytes():
    try:
        return int(pltpu.get_tpu_info().vmem_capacity_bytes)
    except Exception:
        return None


def node_apply(h, weight, bias, *, activation="relu", compute_dtype=None,
               tile_n=None, tile_f=None, k_tile=None,
               vmem_limit_bytes=None, vmem_budget_bytes=None):
    """GCN NodeApplyModule forward: activation(h @ weight + bias).

    h: [N, in_feats]; weight: [in_feats, out_feats]; bias: [out_feats].
    compute_dtype: optional (e.g. jnp.bfloat16) cast of h/weight for MXU/HBM
    savings on v6e/v7x; accumulation stays f32 and the output keeps h's dtype.
    """
    if activation not in ("relu", None):
        raise ValueError("activation must be 'relu' or None")
    apply_relu = activation == "relu"

    N, in_feats = h.shape
    k_in, out_feats = weight.shape
    assert k_in == in_feats and bias.shape == (out_feats,)

    out_dtype = h.dtype
    if compute_dtype is not None:
        h = h.astype(compute_dtype)
        weight = weight.astype(compute_dtype)
    in_itemsize = jnp.dtype(h.dtype).itemsize
    out_itemsize = jnp.dtype(out_dtype).itemsize
    sub = max(8, 32 // in_itemsize)      # sublane multiple: 8 (f32), 16 (bf16), 32 (i8)

    K = in_feats
    F_pad = _round_up(out_feats, LANE)   # lane-dense output stores

    # ---- generation-aware VMEM sizing ----
    vmem_cap = _tpu_vmem_capacity_bytes()
    big_vmem = (vmem_cap is not None) and vmem_cap >= 100 * 1024 * 1024  # v5e / v6e
    if vmem_budget_bytes is None:
        vmem_budget_bytes = (72 if big_vmem else 24) * 1024 * 1024
    if vmem_limit_bytes is None:
        vmem_limit_bytes = (100 if big_vmem else 48) * 1024 * 1024
    budget = int(vmem_budget_bytes)

    n_rounded = _round_up(N, sub)
    want_rows = min(512, n_rounded)
    min_rows = min(256, n_rounded)       # acceptable floor for the MXU M dimension

    def pick_tile_n(rows_fit):
        if tile_n is not None:
            return max(sub, min(_round_up(int(tile_n), sub), n_rounded))
        t = min(want_rows, max(sub, (int(rows_fit) // sub) * sub))
        if not big_vmem:
            # v7x-like (2 TensorCores): >=4 row tiles when N permits, so each core
            # still has >=2 pipelined steps (DMA / MXU overlap).
            t = min(t, max(sub, _round_up(-(-N // 4), sub)))
        return max(sub, min(t, n_rounded))

    # ---- path selection driven by the actual VMEM footprint ----
    if k_tile is not None:
        path = "k"
    elif tile_f is not None:
        path = "f"
    else:
        fixed_sp = K * F_pad * in_itemsize + F_pad * 4          # Buffered(1) weight + bias
        per_row_sp = 2 * K * in_itemsize + 2 * F_pad * out_itemsize
        rows_fit_sp = (budget - fixed_sp) // per_row_sp if budget > fixed_sp else 0
        if rows_fit_sp >= min_rows:
            path = "sp"
        else:
            path = None
            for tf_try in (512, 256):
                fixed_f = 2 * K * tf_try * in_itemsize + 2 * tf_try * 4
                per_row_f = 2 * K * in_itemsize + 2 * tf_try * out_itemsize
                rows_fit_f = (budget - fixed_f) // per_row_f if budget > fixed_f else 0
                if rows_fit_f >= min_rows:
                    path, tile_f = "f", tf_try
                    break
            if path is None:
                path = "k"

    # ---- F padding for weight/bias only (tiny; h is NOT padded/copied in HBM) ----
    if F_pad != out_feats:
        weight = jnp.pad(weight, ((0, 0), (0, F_pad - out_feats)))
        bias = jnp.pad(bias, (0, F_pad - out_feats))
    bias2d = bias.astype(jnp.float32).reshape(1, F_pad)

    cost = pl.CostEstimate(
        flops=int(2 * N * in_feats * out_feats),
        transcendentals=0,
        bytes_accessed=int(N * K * in_itemsize + K * F_pad * in_itemsize
                           + F_pad * 4 + N * F_pad * out_itemsize),
    )

    scratch_shapes = []
    if path == "sp":
        fixed = K * F_pad * in_itemsize + F_pad * 4
        per_row = 2 * K * in_itemsize + 2 * F_pad * out_itemsize
        rows_fit = (budget - fixed) // per_row if budget > fixed else sub
        tn = pick_tile_n(rows_fit)
        kernel = functools.partial(_linear_act_kernel, apply_relu=apply_relu)
        grid = (pl.cdiv(N, tn),)
        in_specs = [
            pl.BlockSpec((tn, K), lambda i: (i, 0)),
            # weight/bias are grid-invariant: single VMEM buffer each
            pl.BlockSpec((K, F_pad), lambda i: (0, 0), pipeline_mode=pl.Buffered(1)),
            pl.BlockSpec((1, F_pad), lambda i: (0, 0), pipeline_mode=pl.Buffered(1)),
        ]
        out_spec = pl.BlockSpec((tn, F_pad), lambda i: (i, 0))
        dim_sem = ("parallel",)

    elif path == "f":
        tf = min(_round_up(int(tile_f), LANE), F_pad)
        fixed = 2 * K * tf * in_itemsize + 2 * tf * 4            # dbl-buffered weight+bias tiles
        per_row = 2 * K * in_itemsize + 2 * tf * out_itemsize
        rows_fit = (budget - fixed) // per_row if budget > fixed else sub
        tn = pick_tile_n(rows_fit)
        kernel = functools.partial(_linear_act_kernel, apply_relu=apply_relu)
        grid = (pl.cdiv(N, tn), pl.cdiv(F_pad, tf))
        in_specs = [
            # h block is grid-invariant over j: fetched once per row tile, stays resident
            pl.BlockSpec((tn, K), lambda i, j: (i, 0)),
            pl.BlockSpec((K, tf), lambda i, j: (0, j)),
            pl.BlockSpec((1, tf), lambda i, j: (0, j)),
        ]
        out_spec = pl.BlockSpec((tn, tf), lambda i, j: (i, j))
        dim_sem = ("parallel", "parallel")

    else:  # path == "k"  (huge contraction dim; rare fallback)
        kt = int(k_tile) if k_tile is not None else 512
        kt = max(256, _round_up(kt, 256))          # MXU-friendly 256 multiples on v6e/v7x
        kt = min(kt, _round_up(K, 256))
        K_pad = _round_up(K, kt)
        # Zero-padding K is REQUIRED here: the h block is a K slice, so OOB/stale
        # garbage in the contraction dim would corrupt the sum (NaN*0=NaN).
        if K_pad != K:
            h = jnp.pad(h, ((0, 0), (0, K_pad - K)))
            weight = jnp.pad(weight, ((0, K_pad - K), (0, 0)))
        acc_in_out = jnp.dtype(out_dtype) == jnp.float32
        fixed = 2 * kt * F_pad * in_itemsize + F_pad * 4         # double-buffered weight + bias
        per_row = 2 * kt * in_itemsize + 2 * F_pad * out_itemsize
        if not acc_in_out:
            per_row += F_pad * 4                                 # f32 accumulator scratch
        rows_fit = (budget - fixed) // per_row if budget > fixed else sub
        tn = pick_tile_n(rows_fit)
        if acc_in_out:
            kernel = functools.partial(_linear_act_ktiled_f32out_kernel,
                                       apply_relu=apply_relu)
        else:
            kernel = functools.partial(_linear_act_ktiled_scratch_kernel,
                                       apply_relu=apply_relu)
            scratch_shapes = [pltpu.VMEM((tn, F_pad), jnp.float32)]
        grid = (pl.cdiv(N, tn), K_pad // kt)
        in_specs = [
            pl.BlockSpec((tn, kt), lambda i, k: (i, k)),
            pl.BlockSpec((kt, F_pad), lambda i, k: (k, 0)),
            pl.BlockSpec((1, F_pad), lambda i, k: (0, 0), pipeline_mode=pl.Buffered(1)),
        ]
        out_spec = pl.BlockSpec((tn, F_pad), lambda i, k: (i, 0))
        dim_sem = ("parallel", "arbitrary")
        # TODO(synk): for simultaneously huge K and huge F, this path should also
        # tile F; not needed for typical GCN layer widths.

    out_padded = pl.pallas_call(
        kernel,
        out_shape=jax.ShapeDtypeStruct((N, F_pad), out_dtype),
        grid_spec=pltpu.PrefetchScalarGridSpec(
            num_scalar_prefetch=0,
            grid=grid,
            in_specs=in_specs,
            out_specs=out_spec,
            scratch_shapes=scratch_shapes,
        ),
        compiler_params=pltpu.CompilerParams(
            dimension_semantics=dim_sem,
            vmem_limit_bytes=int(vmem_limit_bytes),
        ),
        cost_estimate=cost,
    )(h, weight, bias2d)

    # TODO(synk): for tiny graphs (N*in_feats very small) a fused XLA op beats any
    # pallas_call due to per-call/per-step overhead; route on a size threshold.
    return out_padded[:, :out_feats] if F_pad != out_feats else out_padded


# ---------------------------------------------------------------------------
# Demo / correctness check
# ---------------------------------------------------------------------------
if __name__ == "__main__":
    key = jax.random.PRNGKey(0)

    # --- Case 1: small shapes matching the module (single-pass path) ---
    N, in_feats, out_feats = 16, 32, 32
    k_h, k_w, k_b, key = jax.random.split(key, 4)
    bound = 1.0 / (in_feats ** 0.5)
    weight = jax.random.uniform(k_w, (in_feats, out_feats), jnp.float32, -bound, bound)
    bias = jax.random.uniform(k_b, (out_feats,), jnp.float32, -bound, bound)
    h = jax.random.normal(k_h, (N, in_feats), jnp.float32)

    out = jax.block_until_ready(node_apply(h, weight, bias))
    ref = jnp.maximum(h @ weight + bias, 0.0)
    assert out.shape == (N, out_feats)
    assert jnp.allclose(out, ref, atol=1e-4, rtol=1e-5)

    # activation=None variant
    out_lin = jax.block_until_ready(node_apply(h, weight, bias, activation=None))
    assert jnp.allclose(out_lin, h @ weight + bias, atol=1e-4, rtol=1e-5)

    # --- Case 2: non-aligned feature dims + forced K-tiled accumulator path ---
    N2, in2, out2 = 24, 200, 48
    k_h2, k_w2, k_b2, key = jax.random.split(key, 4)
    bound2 = 1.0 / (in2 ** 0.5)
    w2 = jax.random.uniform(k_w2, (in2, out2), jnp.float32, -bound2, bound2)
    b2 = jax.random.uniform(k_b2, (out2,), jnp.float32, -bound2, bound2)
    h2 = jax.random.normal(k_h2, (N2, in2), jnp.float32)

    out_k = jax.block_until_ready(node_apply(h2, w2, b2, k_tile=256))
    ref_k = jnp.maximum(h2 @ w2 + b2, 0.0)
    assert out_k.shape == (N2, out2)
    assert jnp.allclose(out_k, ref_k, atol=1e-4, rtol=1e-5)

    # --- Case 3: forced F-tiled path (non-aligned out_feats, multiple F tiles) ---
    N3, in3, out3 = 40, 64, 300
    k_h3, k_w3, k_b3, key = jax.random.split(key, 4)
    bound3 = 1.0 / (in3 ** 0.5)
    w3 = jax.random.uniform(k_w3, (in3, out3), jnp.float32, -bound3, bound3)
    b3 = jax.random.uniform(k_b3, (out3,), jnp.float32, -bound3, bound3)
    h3 = jax.random.normal(k_h3, (N3, in3), jnp.float32)

    out_f = jax.block_until_ready(node_apply(h3, w3, b3, tile_f=128))
    ref_f = jnp.maximum(h3 @ w3 + b3, 0.0)
    assert out_f.shape == (N3, out3)
    assert jnp.allclose(out_f, ref_f, atol=1e-4, rtol=1e-5)

    # --- Case 4: bf16 compute path (f32 accumulation, f32 output) ---
    out_bf = jax.block_until_ready(node_apply(h, weight, bias,
                                              compute_dtype=jnp.bfloat16))
    assert out_bf.shape == (N, out_feats)
    assert jnp.allclose(out_bf, ref, atol=5e-2, rtol=5e-2)

    print("KERNEL_OK")
</pallas_src>

<mosaic_0001>
module attributes {stable_mosaic.version = 11 : i64} {
  func.func @_linear_act_kernel(%arg0: i32, %arg1: memref<8x32xf32, #tpu.memory_space<vmem>>, %arg2: memref<32x128xf32, #tpu.memory_space<vmem>>, %arg3: memref<1x128xf32, #tpu.memory_space<vmem>>, %arg4: memref<8x128xf32, #tpu.memory_space<vmem>>) attributes {dimension_semantics = [#tpu.dimension_semantics<parallel>], iteration_bounds = array<i64: 2>, scalar_prefetch = 0 : i64, scratch_operands = 0 : i64, tpu.core_type = #tpu.core_type<tc>, window_params = [{transform_indices = @transform_0, window_bounds = array<i64: 8, 32>}, {pipeline_mode = #tpu.pipeline_mode<synchronous>, transform_indices = @transform_1, window_bounds = array<i64: 32, 128>}, {pipeline_mode = #tpu.pipeline_mode<synchronous>, transform_indices = @transform_2, window_bounds = array<i64: 1, 128>}, {transform_indices = @transform_3, window_bounds = array<i64: 8, 128>}]} {
    %c0 = arith.constant 0 : index
    %c0_0 = arith.constant 0 : index
    %0 = vector.load %arg1[%c0, %c0_0] : memref<8x32xf32, #tpu.memory_space<vmem>>, vector<8x32xf32>
    %c0_1 = arith.constant 0 : index
    %c0_2 = arith.constant 0 : index
    %1 = vector.load %arg2[%c0_1, %c0_2] : memref<32x128xf32, #tpu.memory_space<vmem>>, vector<32x128xf32>
    %cst = arith.constant dense<0.000000e+00> : vector<8x128xf32>
    %2 = tpu.matmul %0, %1, %cst {dimension_numbers = #tpu.dot_dimension_numbers<[1], [0], [0], [1], [0, 0, 1, 1], [], []>} : vector<8x32xf32>, vector<32x128xf32>, vector<8x128xf32> -> vector<8x128xf32>
    %c0_3 = arith.constant 0 : index
    %c0_4 = arith.constant 0 : index
    %3 = vector.load %arg3[%c0_3, %c0_4] : memref<1x128xf32, #tpu.memory_space<vmem>>, vector<1x128xf32>
    %4 = vector.broadcast %3 : vector<1x128xf32> to vector<8x128xf32>
    %5 = arith.addf %2, %4 : vector<8x128xf32>
    %cst_5 = arith.constant 0.000000e+00 : f32
    %6 = vector.broadcast %cst_5 : f32 to vector<8x128xf32>
    %7 = arith.maximumf %5, %6 : vector<8x128xf32>
    %c0_6 = arith.constant 0 : index
    %c0_7 = arith.constant 0 : index
    %8 = vector.load %arg4[%c0_6, %c0_7] : memref<8x128xf32, #tpu.memory_space<vmem>>, vector<8x128xf32>
    tpu.vector_store %arg4[%c0_6, %c0_7], %7 {strides = array<i32>} : memref<8x128xf32, #tpu.memory_space<vmem>>, vector<8x128xf32>,
    return
  }
  func.func @transform_0(%arg0: i32) -> (i32, i32) {
    %c0_i32 = arith.constant 0 : i32
    %c0_i32_0 = arith.constant 0 : i32
    return %arg0, %c0_i32 : i32, i32
  }
  func.func @transform_1(%arg0: i32) -> (i32, i32) {
    %c0_i32 = arith.constant 0 : i32
    %c0_i32_0 = arith.constant 0 : i32
    %c0_i32_1 = arith.constant 0 : i32
    return %c0_i32, %c0_i32_0 : i32, i32
  }
  func.func @transform_2(%arg0: i32) -> (i32, i32) {
    %c0_i32 = arith.constant 0 : i32
    %c0_i32_0 = arith.constant 0 : i32
    %c0_i32_1 = arith.constant 0 : i32
    return %c0_i32, %c0_i32_0 : i32, i32
  }
  func.func @transform_3(%arg0: i32) -> (i32, i32) {
    %c0_i32 = arith.constant 0 : i32
    %c0_i32_0 = arith.constant 0 : i32
    return %arg0, %c0_i32 : i32, i32
  }
}

</mosaic_0001>

<llo_original>
// kernel: tpu_custom_call.1
$region0: #{tpu_custom_call.1}
  #allocation0 [shape = 'u32[]', space=smem, size = 0x4, offset = 0x4, fixed_abs, tag = 'smem constant byte address 0x4 - core index']
  #allocation1 [shape = 'u32[144,128]{1,0:T(1,128)}', space=vmem, size = 0x12000, scoped, tag = 'internal scratch']
  %s0 = inlined_call_operand.hbm [shape: f32[16,32], index: 0, kind: input, shape index: {}]
  %s1 = inlined_call_operand.hbm [shape: f32[32,128], index: 1, kind: input, shape index: {}]
  %s2 = inlined_call_operand.vmem [shape: f32[1,128], index: 2, kind: input, shape index: {}]
  %s3 = inlined_call_operand.hbm [shape: f32[16,128], index: 3, kind: output, shape index: {}]
  %s4 = sld [smem:[#allocation0]]
  $region53: #{tpu_custom_call.1} parent=0
    _
  %s6 = ssub.s32 1, %s4
  %s7 = scalar_select 0, %s6, %s4
  $region1: #{tpu_custom_call.1} parent=0
    #allocation2 [shape = 'u8[8192]{0}', space=vmem, size = 0x2000, scoped, tag = 'input window, operand 0']
    #allocation3 [shape = 's32[2]{0}', space=sflag, size = 0x8, scoped, tag = 'scoped memory for tpu_custom_call.1']
    #allocation4 [shape = 's32[2]{0}', space=sflag, size = 0x8, scoped, tag = 'scoped memory for tpu_custom_call.1']
    #allocation5 [shape = 'u8[16384]{0}', space=vmem, size = 0x4000, scoped, tag = 'input window, operand 1, single buffered']
    #allocation6 [shape = 's32[1]{0}', space=sflag, size = 0x4, scoped, tag = 'scoped memory for tpu_custom_call.1']
    #allocation7 [shape = 'u8[8192]{0}', space=vmem, size = 0x2000, scoped, tag = 'output window, operand 0']
    %8 = vsyncpa [#allocation3], 0
    %s9 = scalar_lea.sflag [#allocation3], 1
    %10 = vsyncpa %s9, 0
    %11 = vsyncpa [#allocation6], 0
    %12 = vsyncpa [#allocation4], 0
    %s13 = scalar_lea.sflag [#allocation4], 1
    %14 = vsyncpa %s13, 0
    loop: start=0, step=1, limit=4
    $region2: #{tpu_custom_call.1} parent=1 // loop_pre_header
      _
    $region3: #{tpu_custom_call.1} parent=1 // loop_header
      %s16 = sphi 0, %s20
      %p17 = scmp.ge.s32.totalorder %s16, 4
      %s26 = sphi 0, %s28
      %s29 = sphi 0, %s26
      %s30 = sphi 0, %s29
      %s46 = sphi 0, %s30
      %s50 = sphi 0, %s50
      %s52 = sphi 0, %s50
      %s53 = sphi 0, %s52
      %s67 = sphi 0, %s53
      %s71 = sphi 0, %s71
      %s73 = sphi 0, %s71
      %s74 = sphi 0, %s73
      %s88 = sphi 0, %s74
      %s94 = sphi 0, %s96
      %s97 = sphi 0, %s94
      %s98 = sphi 0, %s97
      %s114 = sphi 0, %s98
    $region4: #{tpu_custom_call.1} parent=1 // loop_header_branch
      %19 = sbr.rel (%p17) target = $region8
    $region5: #{tpu_custom_call.1} parent=1 // loop_body
      %s21 = ssub.s32 %s16, 1
      %s22 = ssub.s32 %s16, 2
      %s23 = sadd.s32 %s16, 1
      %s24 = ssub.s32 %s16, %s23
      %p25 = scmp.eq.s32.totalorder %s24, 0
      %s27 = sadd.s32 %s26, 1
      %s28 = scalar_select %p25, %s26, %s27
      %p31 = pneg %p25
      %p32 = scmp.eq.s32.totalorder %s16, 1
      %p33 = por %p31, %p32
      %p34 = scmp.ne.s32.totalorder %s26, %s29
      %p35 = scmp.eq.s32.totalorder %s16, 0
      %p36 = por %p34, %p35
      %p37 = scmp.ne.s32.totalorder %s26, %s29
      %p38 = scmp.eq.s32.totalorder %s21, 1
      %p39 = por %p37, %p38
      %p40 = scmp.ne.s32.totalorder %s29, %s30
      %p41 = scmp.eq.s32.totalorder %s21, 0
      %p42 = por %p40, %p41
      %p43 = scmp.ne.s32.totalorder %s29, %s30
      %p44 = scmp.eq.s32.totalorder %s22, 1
      %p45 = por %p43, %p44
      %p47 = scmp.ne.s32.totalorder %s30, %s46
      %p48 = scmp.eq.s32.totalorder %s22, 0
      %p49 = por %p47, %p48
      %s51 = sadd.s32 %s50, 1
      %p54 = scmp.eq.s32.totalorder %s16, 1
      %p55 = scmp.ne.s32.totalorder %s50, %s52
      %p56 = scmp.eq.s32.totalorder %s16, 0
      %p57 = por %p55, %p56
      %p58 = scmp.ne.s32.totalorder %s50, %s52
      %p59 = scmp.eq.s32.totalorder %s21, 1
      %p60 = por %p58, %p59
      %p61 = scmp.ne.s32.totalorder %s52, %s53
      %p62 = scmp.eq.s32.totalorder %s21, 0
      %p63 = por %p61, %p62
      %p64 = scmp.ne.s32.totalorder %s52, %s53
      %p65 = scmp.eq.s32.totalorder %s22, 1
      %p66 = por %p64, %p65
      %p68 = scmp.ne.s32.totalorder %s53, %s67
      %p69 = scmp.eq.s32.totalorder %s22, 0
      %p70 = por %p68, %p69
      %s72 = sadd.s32 %s71, 1
      %p75 = scmp.eq.s32.totalorder %s16, 1
      %p76 = scmp.ne.s32.totalorder %s71, %s73
      %p77 = scmp.eq.s32.totalorder %s16, 0
      %p78 = por %p76, %p77
      %p79 = scmp.ne.s32.totalorder %s71, %s73
      %p80 = scmp.eq.s32.totalorder %s21, 1
      %p81 = por %p79, %p80
      %p82 = scmp.ne.s32.totalorder %s73, %s74
      %p83 = scmp.eq.s32.totalorder %s21, 0
      %p84 = por %p82, %p83
      %p85 = scmp.ne.s32.totalorder %s73, %s74
      %p86 = scmp.eq.s32.totalorder %s22, 1
      %p87 = por %p85, %p86
      %p89 = scmp.ne.s32.totalorder %s74, %s88
      %p90 = scmp.eq.s32.totalorder %s22, 0
      %p91 = por %p89, %p90
      %s92 = ssub.s32 %s16, %s23
      %p93 = scmp.eq.s32.totalorder %s92, 0
      %s95 = sadd.s32 %s94, 1
      %s96 = scalar_select %p93, %s94, %s95
      %p99 = pneg %p93
      %p100 = scmp.eq.s32.totalorder %s16, 1
      %p101 = por %p99, %p100
      %p102 = scmp.ne.s32.totalorder %s94, %s97
      %p103 = scmp.eq.s32.totalorder %s16, 0
      %p104 = por %p102, %p103
      %p105 = scmp.ne.s32.totalorder %s94, %s97
      %p106 = scmp.eq.s32.totalorder %s21, 1
      %p107 = por %p105, %p106
      %p108 = scmp.ne.s32.totalorder %s97, %s98
      %p109 = scmp.eq.s32.totalorder %s21, 0
      %p110 = por %p108, %p109
      %p111 = scmp.ne.s32.totalorder %s97, %s98
      %p112 = scmp.eq.s32.totalorder %s22, 1
      %p113 = por %p111, %p112
      %p115 = scmp.ne.s32.totalorder %s98, %s114
      %p116 = scmp.eq.s32.totalorder %s22, 0
      %p117 = por %p115, %p116
      %p118 = scmp.le.s32.totalorder 1, %s16
      %p119 = scmp.lt.s32.totalorder %s16, 3
      %p120 = pnand %p118, %p119
      %p121 = pneg %p120
      // Predicated region
      $region9: #{tpu_custom_call.1} parent=5 // pred_check
        _
      $region10: #{tpu_custom_call.1} parent=5 // pred_check_branch
        %123 = sbr.rel (%p120) target = $region12
      $region11: #{tpu_custom_call.1} parent=5 // pred_region
        %s124 = ssub.s32 %s16, 1
        // Predicated region
        $region13: #{tpu_custom_call.1} parent=11 // pred_check
          %p125 = pneg %p63
        $region14: #{tpu_custom_call.1} parent=11 // pred_check_branch
          %127 = sbr.rel (%p125) target = $region16
        $region15: #{tpu_custom_call.1} parent=11 // pred_region
          %s129 = ssub.s32 512, 512
          %130 = vsyncadd [#allocation6], %s129
          %s131 = sshll.u32 [#allocation5], 4
          %s132 = int_to_ptr.vmem [resolvable:$true] %s131
          %137 = dma.hbm_to_vmem [thread:$0]  %s1, 512, %s132, [#allocation6], 128, 128, 8
        $region16: #{tpu_custom_call.1} parent=11 // pred_fallthru
          _
        // Predicated region
        $region17: #{tpu_custom_call.1} parent=11 // pred_check
          %p138 = pneg %p84
        $region18: #{tpu_custom_call.1} parent=11 // pred_check_branch
          %140 = sbr.rel (%p138) target = $region20
        $region19: #{tpu_custom_call.1} parent=11 // pred_region
          _
        $region20: #{tpu_custom_call.1} parent=11 // pred_fallthru
          _
      $region12: #{tpu_custom_call.1} parent=5 // pred_fallthru
        _
      %p141 = scmp.lt.s32.totalorder %s16, 2
      // Predicated region
      $region21: #{tpu_custom_call.1} parent=5 // pred_check
        %p142 = pneg %p141
      $region22: #{tpu_custom_call.1} parent=5 // pred_check_branch
        %144 = sbr.rel (%p142) target = $region24
      $region23: #{tpu_custom_call.1} parent=5 // pred_region
        // Predicated region
        $region25: #{tpu_custom_call.1} parent=23 // pred_check
          %p145 = pneg %p36
        $region26: #{tpu_custom_call.1} parent=23 // pred_check_branch
          %147 = sbr.rel (%p145) target = $region28
        $region27: #{tpu_custom_call.1} parent=23 // pred_region
          %s148 = sand.u32 %s26, 1
          %s149 = scalar_lea.sflag [#allocation3], %s148
          %s150 = sand.u32 %s26, 1
          %s151 = smul.addr %s150, 8
          %s152 = scalar_lea.vmem [#allocation2], %s151
          %s154 = ssub.s32 128, 128
          %155 = vsyncadd %s149, %s154
          %s156 = smul.addr %s16, 128
          %s157 = scalar_lea.hbm %s0, %s156
          %s159 = sshll.u32 %s152, 4
          %s160 = int_to_ptr.vmem [resolvable:$true] %s159
          %162 = dma.hbm_to_vmem [thread:$0]  %s157, 128, %s160, %s149
        $region28: #{tpu_custom_call.1} parent=23 // pred_fallthru
          _
      $region24: #{tpu_custom_call.1} parent=5 // pred_fallthru
        _
      %p163 = scmp.le.s32.totalorder 1, %s16
      %p164 = scmp.lt.s32.totalorder %s16, 3
      %p165 = pnand %p163, %p164
      %p166 = pneg %p165
      // Predicated region
      $region29: #{tpu_custom_call.1} parent=5 // pred_check
        _
      $region30: #{tpu_custom_call.1} parent=5 // pred_check_branch
        %168 = sbr.rel (%p165) target = $region32
      $region31: #{tpu_custom_call.1} parent=5 // pred_region
        %s169 = ssub.s32 %s16, 1
        %s170 = sand.u32 %s29, 1
        %s171 = scalar_lea.sflag [#allocation3], %s170
        %s172 = sand.u32 %s29, 1
        %s173 = smul.addr %s172, 8
        %s174 = scalar_lea.vmem [#allocation2], %s173
        // Predicated region
        $region33: #{tpu_custom_call.1} parent=31 // pred_check
          %p175 = pneg %p42
        $region34: #{tpu_custom_call.1} parent=31 // pred_check_branch
          %177 = sbr.rel (%p175) target = $region36
        $region35: #{tpu_custom_call.1} parent=31 // pred_region
          %178 = dma.done %s171, 128
        $region36: #{tpu_custom_call.1} parent=31 // pred_fallthru
          _
        // Predicated region
        $region37: #{tpu_custom_call.1} parent=31 // pred_check
          %p179 = pneg %p63
        $region38: #{tpu_custom_call.1} parent=31 // pred_check_branch
          %181 = sbr.rel (%p179) target = $region40
        $region39: #{tpu_custom_call.1} parent=31 // pred_region
          %182 = dma.done [#allocation6], 512
        $region40: #{tpu_custom_call.1} parent=31 // pred_fallthru
          _
        %s183 = sand.u32 %s29, 1
        %s184 = scalar_lea.sflag [#allocation3], %s183
        %s185 = sand.u32 %s29, 1
        %s186 = smul.addr %s185, 8
        %s187 = scalar_lea.vmem [#allocation2], %s186
        %p188 = pneg %p42
        %p189 = pneg %p39
        %p190 = pneg %p63
        %p191 = pneg %p60
        %p192 = pneg %p84
        %p193 = pneg %p81
        %p194 = pneg %p110
        %p195 = pneg %p107
        %s196 = sand.u32 %s97, 1
        %s197 = scalar_lea.sflag [#allocation4], %s196
        %s198 = sand.u32 %s97, 1
        %s199 = smul.addr %s198, 8
        %s200 = scalar_lea.vmem [#allocation7], %s199
        %v201 = vld [vmem:[%s174] sm:$0xff]
        %v202 = vld [vmem:[#allocation5] sm:$0xff]
        %v203 = vld [vmem:[#allocation5 + $0x8] sm:$0xff]
        %v204 = vld [vmem:[#allocation5 + $0x10] sm:$0xff]
        %v205 = vld [vmem:[#allocation5 + $0x18] sm:$0xff]
        %v206 = vld [vmem:[%s2] sm:$0x1]
        %v208 = vlaneseq
        %v209 = vshrl.u32 %v208, 7
        %v210 = vsub.s32 0, %v209
        %v211 = vrot.slane %v206, %v210
        %vm213 = vcmask 261120
        %v215 = vsel %vm213, %v201, 0
        %217 = vmatprep.subr.mxu0 0.0
        %218 = vmatpush1.msra.mxu0 0.0
        %219 = vmatprep.subr.mxu0 0.0
        %220 = vmatpush1.msra.mxu0 0.0
        %221 = vmatprep.subr.mxu0 0.0
        %222 = vmatpush1.msra.mxu0 0.0
        %223 = vmatprep.subr.mxu0 0.0
        %224 = vmatpush1.msra.mxu0 0.0
        %225 = vmatprep.subr.mxu0 0.0
        %226 = vmatpush1.msra.mxu0 0.0
        %227 = vmatprep.subr.mxu0 0.0
        %228 = vmatpush1.msra.mxu0 0.0
        %229 = vmatprep.subr.mxu0 0.0
        %230 = vmatpush1.msra.mxu0 0.0
        %231 = vmatprep.subr.mxu0 0.0
        %232 = vmatpush1.msra.mxu0 0.0
        %233 = vmatprep.subr.mxu0 0.0
        %234 = vmatpush1.msra.mxu0 0.0
        %235 = vmatprep.subr.mxu0 0.0
        %236 = vmatpush1.msra.mxu0 0.0
        %237 = vmatprep.subr.mxu0 0.0
        %238 = vmatpush1.msra.mxu0 0.0
        %239 = vmatprep.subr.mxu0 0.0
        %240 = vmatpush1.msra.mxu0 0.0
        %241 = vmatprep.subr.mxu0 0.0
        %242 = vmatpush1.msra.mxu0 %v205
        %243 = vmatprep.subr.mxu0 0.0
        %244 = vmatpush1.msra.mxu0 %v204
        %245 = vmatprep.subr.mxu0 0.0
        %246 = vmatpush1.msra.mxu0 %v203
        %247 = vmatprep.subr.mxu0 0.0
        %248 = vmatpush1.msra.mxu0 %v202
        %249 = vmatprep.subr.mxu0 0.0
        %250 = vmatpush2.msra.mxu0 0.0
        %251 = vmatprep.subr.mxu0 0.0
        %252 = vmatpush2.msra.mxu0 0.0
        %253 = vmatprep.subr.mxu0 0.0
        %254 = vmatpush2.msra.mxu0 0.0
        %255 = vmatprep.subr.mxu0 0.0
        %256 = vmatpush2.msra.mxu0 0.0
        %257 = vmatprep.subr.mxu0 0.0
        %258 = vmatpush2.msra.mxu0 0.0
        %259 = vmatprep.subr.mxu0 0.0
        %260 = vmatpush2.msra.mxu0 0.0
        %261 = vmatprep.subr.mxu0 0.0
        %262 = vmatpush2.msra.mxu0 0.0
        %263 = vmatprep.subr.mxu0 0.0
        %264 = vmatpush2.msra.mxu0 0.0
        %265 = vmatprep.subr.mxu0 0.0
        %266 = vmatpush2.msra.mxu0 0.0
        %267 = vmatprep.subr.mxu0 0.0
        %268 = vmatpush2.msra.mxu0 0.0
        %269 = vmatprep.subr.mxu0 0.0
        %270 = vmatpush2.msra.mxu0 0.0
        %271 = vmatprep.subr.mxu0 0.0
        %272 = vmatpush2.msra.mxu0 0.0
        %273 = vmatprep.subr.mxu0 0.0
        %274 = vmatpush2.msra.mxu0 0.0
        %275 = vmatprep.subr.mxu0 0.0
        %276 = vmatpush2.msra.mxu0 0.0
        %277 = vmatprep.subr.mxu0 0.0
        %278 = vmatpush2.msra.mxu0 0.0
        %279 = vmatprep.subr.mxu0 0.0
        %280 = vmatpush2.msra.mxu0 0.0
        %281 = vmatprep.mubr.f32.mxu0 0.0
        %282 = vmatmul.mubr.f32.gmra.mxu0 %v215
        %v283 = vpop.f32.mrf.mxu0
        %v284 = vadd.f32 %v211, %v283
        %v285 = vpop.f32.mrf.mxu0
        %286 = vdwg.mxu0
        %v287 = vmax.f32 %v284, 0.0
        %288 = vst [vmem:[%s200] sm:$0xff] %v287
        %s289 = sand.u32 %s97, 1
        %s290 = scalar_lea.sflag [#allocation4], %s289
        %s291 = sand.u32 %s97, 1
        %s292 = smul.addr %s291, 8
        %s293 = scalar_lea.vmem [#allocation7], %s292
        // Predicated region
        $region41: #{tpu_custom_call.1} parent=31 // pred_check
          %p294 = pneg %p107
        $region42: #{tpu_custom_call.1} parent=31 // pred_check_branch
          %296 = sbr.rel (%p294) target = $region44
        $region43: #{tpu_custom_call.1} parent=31 // pred_region
          %s298 = ssub.s32 128, 128
          %299 = vsyncadd %s290, %s298
          %s300 = smul.addr %s21, 128
          %s301 = scalar_lea.hbm %s3, %s300
          %s303 = sshll.u32 %s293, 4
          %s304 = int_to_ptr.vmem [resolvable:$true] %s303
          %306 = dma.vmem_to_hbm [thread:$0]  %s304, 128, %s301, %s290
        $region44: #{tpu_custom_call.1} parent=31 // pred_fallthru
          _
      $region32: #{tpu_custom_call.1} parent=5 // pred_fallthru
        _
      %p307 = scmp.le.s32.totalorder 2, %s16
      // Predicated region
      $region45: #{tpu_custom_call.1} parent=5 // pred_check
        %p308 = pneg %p307
      $region46: #{tpu_custom_call.1} parent=5 // pred_check_branch
        %310 = sbr.rel (%p308) target = $region48
      $region47: #{tpu_custom_call.1} parent=5 // pred_region
        %s311 = ssub.s32 %s16, 2
        // Predicated region
        $region49: #{tpu_custom_call.1} parent=47 // pred_check
          %p312 = pneg %p113
        $region50: #{tpu_custom_call.1} parent=47 // pred_check_branch
          %314 = sbr.rel (%p312) target = $region52
        $region51: #{tpu_custom_call.1} parent=47 // pred_region
          %s315 = sand.u32 %s98, 1
          %s316 = scalar_lea.sflag [#allocation4], %s315
          %s317 = sand.u32 %s98, 1
          %s318 = smul.addr %s317, 8
          %s319 = scalar_lea.vmem [#allocation7], %s318
          %320 = dma.done %s316, 128
        $region52: #{tpu_custom_call.1} parent=47 // pred_fallthru
          _
      $region48: #{tpu_custom_call.1} parent=5 // pred_fallthru
        _
    $region6: #{tpu_custom_call.1} parent=1 // loop_footer
      %s20 = sadd.s32 1, %s16
    $region7: #{tpu_custom_call.1} parent=1 // loop_footer_branch
      %15 = sbr.rel target = $region3
    $region8: #{tpu_custom_call.1} parent=1 // loop_exit
      _
    %321 = vsyncpa [#allocation3], 1
    %s322 = scalar_lea.sflag [#allocation3], 1
    %323 = vsyncpa %s322, 1
    %324 = vsyncpa [#allocation6], 1
    %325 = vsyncpa [#allocation4], 1
    %s326 = scalar_lea.sflag [#allocation4], 1
    %327 = vsyncpa %s326, 1

</llo_original>
